<compile_context>
chip_gen: v6e
topology: v6e:2x2x1
jax: 0.10.0
libtpu: 0.0.40
codegen_flags: <defaults>
</compile_context>

<pallas_src>
import jax
import jax.numpy as jnp
from jax.experimental import pallas as pl
from jax.experimental.pallas import tpu as pltpu

STATE_DIM = 55
ACTION_DIM = 21
HIDDEN_DIM = 128
IN_DIM = STATE_DIM + ACTION_DIM   # 76  (fed unpadded; lane padding is free in VMEM)
OUT_PAD = 128                     # lane-dense padded output width
DEFAULT_TILE_B = 1024             # batch tile; sweep 512..2048 on real workloads


def _round_up(n, m):
    return ((n + m - 1) // m) * m


def _select_tile_b(B, tile_b):
    """Pick a batch tile: big enough to amortize per-step overhead, >=2 steps
    when possible (keeps both v7x TensorCores busy), multiple of 16 for bf16
    sublane packing, and never a degenerate block larger than the array."""
    if B <= 16:
        return B                               # single full-array block (always legal)
    tile_b = max(16, min(tile_b, _round_up(B, 16)))
    if pl.cdiv(B, tile_b) < 2:                 # ensure >=2 "parallel" grid steps
        tile_b = max(16, _round_up(pl.cdiv(B, 2), 16))
    return tile_b


def _mlp_kernel(x_ref, w1_ref, w2_ref, w3_ref, w4_ref, b_ref, o_ref):
    # bf16 MXU operands, f32 accumulation; bias-add + ReLU stay f32 on the VPU
    # (v5e has no bf16 VALU).  In-kernel cast avoids a wrapper-side HBM pass.
    x = x_ref[...].astype(jnp.bfloat16)                                   # [TB, 76]
    h = jnp.dot(x, w1_ref[...], preferred_element_type=jnp.float32) + b_ref[0:1, :]
    h = jnp.maximum(h, 0.0).astype(jnp.bfloat16)
    h = jnp.dot(h, w2_ref[...], preferred_element_type=jnp.float32) + b_ref[1:2, :]
    h = jnp.maximum(h, 0.0).astype(jnp.bfloat16)
    h = jnp.dot(h, w3_ref[...], preferred_element_type=jnp.float32) + b_ref[2:3, :]
    h = jnp.maximum(h, 0.0).astype(jnp.bfloat16)
    o = jnp.dot(h, w4_ref[...], preferred_element_type=jnp.float32) + b_ref[3:4, :]
    o_ref[...] = o.astype(o_ref.dtype)                                    # bf16 writeback


def _pack_params(params):
    """Cast weights to bf16 (w4 padded 55->128 cols) and pack the four biases
    into one resident [4, 128] f32 array (row 3 zero-padded past STATE_DIM)."""
    (w1, b1), (w2, b2), (w3, b3), (w4, b4) = params
    w4p = jnp.zeros((HIDDEN_DIM, OUT_PAD), jnp.float32).at[:, :STATE_DIM].set(w4)
    ws = (w1.astype(jnp.bfloat16), w2.astype(jnp.bfloat16),
          w3.astype(jnp.bfloat16), w4p.astype(jnp.bfloat16))
    b = jnp.zeros((4, OUT_PAD), jnp.float32)
    b = b.at[0, :HIDDEN_DIM].set(b1.reshape(-1))
    b = b.at[1, :HIDDEN_DIM].set(b2.reshape(-1))
    b = b.at[2, :HIDDEN_DIM].set(b3.reshape(-1))
    b = b.at[3, :STATE_DIM].set(b4.reshape(-1))
    return ws, b


def mlp_state_predictor(x, params, *, tile_b=DEFAULT_TILE_B,
                        lane_dense_output=False):
    """x: [B, IN_DIM] float -> [B, STATE_DIM] bf16 (fused 4-layer MLP).

    With lane_dense_output=True, returns the [B, 128] lane-dense slab
    (columns 55..127 are exactly zero) so a downstream consumer can fuse the
    feature slice instead of paying a separate HBM pass.
    """
    B = x.shape[0]
    (w1, w2, w3, w4), b_packed = _pack_params(params)   # pack once per call; cache in practice

    tile_b = _select_tile_b(B, tile_b)
    grid = (pl.cdiv(B, tile_b),)

    def resident(shape):  # full array, stays VMEM-resident across all grid steps
        return pl.BlockSpec(shape, lambda i: (0, 0))

    flops = 2 * B * (IN_DIM * HIDDEN_DIM + 2 * HIDDEN_DIM * HIDDEN_DIM
                     + HIDDEN_DIM * OUT_PAD)
    bytes_accessed = (B * IN_DIM * jnp.dtype(x.dtype).itemsize      # input read
                      + B * OUT_PAD * 2                             # bf16 output write
                      + (w1.size + w2.size + w3.size + w4.size) * 2
                      + b_packed.size * 4)

    out = pl.pallas_call(
        _mlp_kernel,
        out_shape=jax.ShapeDtypeStruct((B, OUT_PAD), jnp.bfloat16),
        grid_spec=pltpu.PrefetchScalarGridSpec(
            num_scalar_prefetch=0,
            grid=grid,
            in_specs=[
                pl.BlockSpec((tile_b, IN_DIM), lambda i: (i, 0)),   # x batch tile
                resident(w1.shape), resident(w2.shape),
                resident(w3.shape), resident(w4.shape),
                resident(b_packed.shape),
            ],
            out_specs=pl.BlockSpec((tile_b, OUT_PAD), lambda i: (i, 0)),
        ),
        compiler_params=pltpu.CompilerParams(
            dimension_semantics=("parallel",)),
        cost_estimate=pl.CostEstimate(flops=flops, transcendentals=0,
                                      bytes_accessed=bytes_accessed),
    )(x, w1, w2, w3, w4, b_packed)

    if lane_dense_output:
        return out
    return out[:, :STATE_DIM]


def init_params(key):
    """Init mirroring PyTorch nn.Linear default U(-1/sqrt(fan_in), 1/sqrt(fan_in)).
    Weights stored [in, out] (transposed vs. PyTorch's [out, in]); bias [out]."""
    dims = [(IN_DIM, HIDDEN_DIM), (HIDDEN_DIM, HIDDEN_DIM),
            (HIDDEN_DIM, HIDDEN_DIM), (HIDDEN_DIM, STATE_DIM)]
    params = []
    for (fan_in, fan_out) in dims:
        key, kw, kb = jax.random.split(key, 3)
        bound = 1.0 / jnp.sqrt(fan_in)
        w = jax.random.uniform(kw, (fan_in, fan_out), jnp.float32, -bound, bound)
        b = jax.random.uniform(kb, (fan_out,), jnp.float32, -bound, bound)
        params.append((w, b))
    return params


def reference_forward(x, params):
    """Plain-JAX f32 reference of the PyTorch forward pass."""
    (w1, b1), (w2, b2), (w3, b3), (w4, b4) = params
    h = jnp.maximum(x @ w1 + b1, 0.0)
    h = jnp.maximum(h @ w2 + b2, 0.0)
    h = jnp.maximum(h @ w3 + b3, 0.0)
    return h @ w4 + b4


if __name__ == "__main__":
    key = jax.random.PRNGKey(0)
    key, kx1, kx2 = jax.random.split(key, 3)
    params = init_params(key)

    # Small deployment-style batch: single full-array block.
    batch = 8
    x = jax.random.normal(kx1, (batch, IN_DIM), jnp.float32)
    out = jax.block_until_ready(mlp_state_predictor(x, params))
    ref = reference_forward(x, params)
    assert out.shape == (batch, STATE_DIM)
    assert jnp.allclose(out.astype(jnp.float32), ref, atol=3e-2, rtol=3e-2), \
        "mismatch vs reference (B=8)"

    # Larger batch: multi-step parallel grid with a partial tail tile.
    batch2 = 200
    x2 = jax.random.normal(kx2, (batch2, IN_DIM), jnp.float32)
    out2 = jax.block_until_ready(mlp_state_predictor(x2, params, tile_b=64))
    ref2 = reference_forward(x2, params)
    assert out2.shape == (batch2, STATE_DIM)
    assert jnp.allclose(out2.astype(jnp.float32), ref2, atol=3e-2, rtol=3e-2), \
        "mismatch vs reference (B=200)"

    # Default tiling path (auto-split into >=2 parallel steps) + lane-dense slab.
    out3 = jax.block_until_ready(mlp_state_predictor(x2, params))
    assert jnp.allclose(out3.astype(jnp.float32), ref2, atol=3e-2, rtol=3e-2), \
        "mismatch vs reference (B=200, default tile)"
    slab = jax.block_until_ready(
        mlp_state_predictor(x2, params, lane_dense_output=True))
    assert slab.shape == (batch2, OUT_PAD)
    assert jnp.allclose(slab[:, STATE_DIM:].astype(jnp.float32), 0.0), \
        "padded output columns must be zero"

    print("KERNEL_OK")
</pallas_src>

<mosaic_0001>
module attributes {stable_mosaic.version = 11 : i64} {
  func.func @_mlp_kernel(%arg0: i32, %arg1: memref<8x76xf32, #tpu.memory_space<vmem>>, %arg2: memref<76x128xbf16, #tpu.memory_space<vmem>>, %arg3: memref<128x128xbf16, #tpu.memory_space<vmem>>, %arg4: memref<128x128xbf16, #tpu.memory_space<vmem>>, %arg5: memref<128x128xbf16, #tpu.memory_space<vmem>>, %arg6: memref<4x128xf32, #tpu.memory_space<vmem>>, %arg7: memref<8x128xbf16, #tpu.memory_space<vmem>>) attributes {dimension_semantics = [#tpu.dimension_semantics<parallel>], iteration_bounds = array<i64: 1>, scalar_prefetch = 0 : i64, scratch_operands = 0 : i64, tpu.core_type = #tpu.core_type<tc>, window_params = [{transform_indices = @transform_0, window_bounds = array<i64: 8, 76>}, {pipeline_mode = #tpu.pipeline_mode<synchronous>, transform_indices = @transform_1, window_bounds = array<i64: 76, 128>}, {pipeline_mode = #tpu.pipeline_mode<synchronous>, transform_indices = @transform_2, window_bounds = array<i64: 128, 128>}, {pipeline_mode = #tpu.pipeline_mode<synchronous>, transform_indices = @transform_3, window_bounds = array<i64: 128, 128>}, {pipeline_mode = #tpu.pipeline_mode<synchronous>, transform_indices = @transform_4, window_bounds = array<i64: 128, 128>}, {pipeline_mode = #tpu.pipeline_mode<synchronous>, transform_indices = @transform_5, window_bounds = array<i64: 4, 128>}, {transform_indices = @transform_6, window_bounds = array<i64: 8, 128>}]} {
    %c0 = arith.constant 0 : index
    %c0_0 = arith.constant 0 : index
    %0 = vector.load %arg1[%c0, %c0_0] : memref<8x76xf32, #tpu.memory_space<vmem>>, vector<8x76xf32>
    %1 = arith.truncf %0 : vector<8x76xf32> to vector<8x76xbf16>
    %c0_1 = arith.constant 0 : index
    %c0_2 = arith.constant 0 : index
    %2 = vector.load %arg2[%c0_1, %c0_2] : memref<76x128xbf16, #tpu.memory_space<vmem>>, vector<76x128xbf16>
    %cst = arith.constant dense<0.000000e+00> : vector<8x128xf32>
    %3 = tpu.matmul %1, %2, %cst {dimension_numbers = #tpu.dot_dimension_numbers<[1], [0], [0], [1], [0, 0, 1, 1], [], []>} : vector<8x76xbf16>, vector<76x128xbf16>, vector<8x128xf32> -> vector<8x128xf32>
    %c0_3 = arith.constant 0 : index
    %c0_4 = arith.constant 0 : index
    %4 = vector.load %arg6[%c0_3, %c0_4] : memref<4x128xf32, #tpu.memory_space<vmem>>, vector<1x128xf32>
    %5 = vector.broadcast %4 : vector<1x128xf32> to vector<8x128xf32>
    %6 = arith.addf %3, %5 : vector<8x128xf32>
    %cst_5 = arith.constant 0.000000e+00 : f32
    %7 = vector.broadcast %cst_5 : f32 to vector<8x128xf32>
    %8 = arith.maximumf %6, %7 : vector<8x128xf32>
    %9 = arith.truncf %8 : vector<8x128xf32> to vector<8x128xbf16>
    %c0_6 = arith.constant 0 : index
    %c0_7 = arith.constant 0 : index
    %10 = vector.load %arg3[%c0_6, %c0_7] : memref<128x128xbf16, #tpu.memory_space<vmem>>, vector<128x128xbf16>
    %cst_8 = arith.constant dense<0.000000e+00> : vector<8x128xf32>
    %11 = tpu.matmul %9, %10, %cst_8 {dimension_numbers = #tpu.dot_dimension_numbers<[1], [0], [0], [1], [0, 0, 1, 1], [], []>} : vector<8x128xbf16>, vector<128x128xbf16>, vector<8x128xf32> -> vector<8x128xf32>
    %c1 = arith.constant 1 : index
    %c0_9 = arith.constant 0 : index
    %12 = vector.load %arg6[%c1, %c0_9] : memref<4x128xf32, #tpu.memory_space<vmem>>, vector<1x128xf32>
    %13 = vector.broadcast %12 : vector<1x128xf32> to vector<8x128xf32>
    %14 = arith.addf %11, %13 : vector<8x128xf32>
    %cst_10 = arith.constant 0.000000e+00 : f32
    %15 = vector.broadcast %cst_10 : f32 to vector<8x128xf32>
    %16 = arith.maximumf %14, %15 : vector<8x128xf32>
    %17 = arith.truncf %16 : vector<8x128xf32> to vector<8x128xbf16>
    %c0_11 = arith.constant 0 : index
    %c0_12 = arith.constant 0 : index
    %18 = vector.load %arg4[%c0_11, %c0_12] : memref<128x128xbf16, #tpu.memory_space<vmem>>, vector<128x128xbf16>
    %cst_13 = arith.constant dense<0.000000e+00> : vector<8x128xf32>
    %19 = tpu.matmul %17, %18, %cst_13 {dimension_numbers = #tpu.dot_dimension_numbers<[1], [0], [0], [1], [0, 0, 1, 1], [], []>} : vector<8x128xbf16>, vector<128x128xbf16>, vector<8x128xf32> -> vector<8x128xf32>
    %c2 = arith.constant 2 : index
    %c0_14 = arith.constant 0 : index
    %20 = vector.load %arg6[%c2, %c0_14] : memref<4x128xf32, #tpu.memory_space<vmem>>, vector<1x128xf32>
    %21 = vector.broadcast %20 : vector<1x128xf32> to vector<8x128xf32>
    %22 = arith.addf %19, %21 : vector<8x128xf32>
    %cst_15 = arith.constant 0.000000e+00 : f32
    %23 = vector.broadcast %cst_15 : f32 to vector<8x128xf32>
    %24 = arith.maximumf %22, %23 : vector<8x128xf32>
    %25 = arith.truncf %24 : vector<8x128xf32> to vector<8x128xbf16>
    %c0_16 = arith.constant 0 : index
    %c0_17 = arith.constant 0 : index
    %26 = vector.load %arg5[%c0_16, %c0_17] : memref<128x128xbf16, #tpu.memory_space<vmem>>, vector<128x128xbf16>
    %cst_18 = arith.constant dense<0.000000e+00> : vector<8x128xf32>
    %27 = tpu.matmul %25, %26, %cst_18 {dimension_numbers = #tpu.dot_dimension_numbers<[1], [0], [0], [1], [0, 0, 1, 1], [], []>} : vector<8x128xbf16>, vector<128x128xbf16>, vector<8x128xf32> -> vector<8x128xf32>
    %c3 = arith.constant 3 : index
    %c0_19 = arith.constant 0 : index
    %28 = vector.load %arg6[%c3, %c0_19] : memref<4x128xf32, #tpu.memory_space<vmem>>, vector<1x128xf32>
    %29 = vector.broadcast %28 : vector<1x128xf32> to vector<8x128xf32>
    %30 = arith.addf %27, %29 : vector<8x128xf32>
    %31 = arith.truncf %30 : vector<8x128xf32> to vector<8x128xbf16>
    %c0_20 = arith.constant 0 : index
    %c0_21 = arith.constant 0 : index
    %32 = vector.load %arg7[%c0_20, %c0_21] : memref<8x128xbf16, #tpu.memory_space<vmem>>, vector<8x128xbf16>
    tpu.vector_store %arg7[%c0_20, %c0_21], %31 {strides = array<i32>} : memref<8x128xbf16, #tpu.memory_space<vmem>>, vector<8x128xbf16>,
    return
  }
  func.func @transform_0(%arg0: i32) -> (i32, i32) {
    %c0_i32 = arith.constant 0 : i32
    %c0_i32_0 = arith.constant 0 : i32
    return %arg0, %c0_i32 : i32, i32
  }
  func.func @transform_1(%arg0: i32) -> (i32, i32) {
    %c0_i32 = arith.constant 0 : i32
    %c0_i32_0 = arith.constant 0 : i32
    %c0_i32_1 = arith.constant 0 : i32
    return %c0_i32, %c0_i32_0 : i32, i32
  }
  func.func @transform_2(%arg0: i32) -> (i32, i32) {
    %c0_i32 = arith.constant 0 : i32
    %c0_i32_0 = arith.constant 0 : i32
    %c0_i32_1 = arith.constant 0 : i32
    return %c0_i32, %c0_i32_0 : i32, i32
  }
  func.func @transform_3(%arg0: i32) -> (i32, i32) {
    %c0_i32 = arith.constant 0 : i32
    %c0_i32_0 = arith.constant 0 : i32
    %c0_i32_1 = arith.constant 0 : i32
    return %c0_i32, %c0_i32_0 : i32, i32
  }
  func.func @transform_4(%arg0: i32) -> (i32, i32) {
    %c0_i32 = arith.constant 0 : i32
    %c0_i32_0 = arith.constant 0 : i32
    %c0_i32_1 = arith.constant 0 : i32
    return %c0_i32, %c0_i32_0 : i32, i32
  }
  func.func @transform_5(%arg0: i32) -> (i32, i32) {
    %c0_i32 = arith.constant 0 : i32
    %c0_i32_0 = arith.constant 0 : i32
    %c0_i32_1 = arith.constant 0 : i32
    return %c0_i32, %c0_i32_0 : i32, i32
  }
  func.func @transform_6(%arg0: i32) -> (i32, i32) {
    %c0_i32 = arith.constant 0 : i32
    %c0_i32_0 = arith.constant 0 : i32
    return %arg0, %c0_i32 : i32, i32
  }
}

</mosaic_0001>

<llo_original>
// kernel: tpu_custom_call.1
$region0: #{tpu_custom_call.1}
  #allocation0 [shape = 'u32[]', space=smem, size = 0x4, offset = 0x4, fixed_abs, tag = 'smem constant byte address 0x4 - core index']
  #allocation1 [shape = 'u32[144,128]{1,0:T(1,128)}', space=vmem, size = 0x12000, scoped, tag = 'internal scratch']
  %s0 = inlined_call_operand.hbm [shape: f32[8,76], index: 0, kind: input, shape index: {}]
  %s1 = inlined_call_operand.hbm [shape: bf16[76,128], index: 1, kind: input, shape index: {}]
  %s2 = inlined_call_operand.hbm [shape: bf16[128,128], index: 2, kind: input, shape index: {}]
  %s3 = inlined_call_operand.hbm [shape: bf16[128,128], index: 3, kind: input, shape index: {}]
  %s4 = inlined_call_operand.hbm [shape: bf16[128,128], index: 4, kind: input, shape index: {}]
  %s5 = inlined_call_operand.vmem [shape: f32[4,128], index: 5, kind: input, shape index: {}]
  %s6 = inlined_call_operand.hbm [shape: bf16[8,128], index: 6, kind: output, shape index: {}]
  %s7 = sld [smem:[#allocation0]]
  $region54: #{tpu_custom_call.1} parent=0
    _
  %s9 = ssub.s32 1, %s7
  %s10 = scalar_select 0, %s9, %s7
  $region1: #{tpu_custom_call.1} parent=0
    #allocation2 [shape = 'u8[4096]{0}', space=vmem, size = 0x1000, scoped, tag = 'input window, operand 0, single buffered']
    #allocation3 [shape = 's32[1]{0}', space=sflag, size = 0x4, scoped, tag = 'scoped memory for tpu_custom_call.1']
    #allocation4 [shape = 's32[1]{0}', space=sflag, size = 0x4, scoped, tag = 'scoped memory for tpu_custom_call.1']
    #allocation5 [shape = 'u8[20480]{0}', space=vmem, size = 0x5000, scoped, tag = 'input window, operand 1, single buffered']
    #allocation6 [shape = 's32[1]{0}', space=sflag, size = 0x4, scoped, tag = 'scoped memory for tpu_custom_call.1']
    #allocation7 [shape = 'u8[32768]{0}', space=vmem, size = 0x8000, scoped, tag = 'input window, operand 2, single buffered']
    #allocation8 [shape = 'u8[32768]{0}', space=vmem, size = 0x8000, scoped, tag = 'input window, operand 3, single buffered']
    #allocation9 [shape = 's32[1]{0}', space=sflag, size = 0x4, scoped, tag = 'scoped memory for tpu_custom_call.1']
    #allocation10 [shape = 'u8[32768]{0}', space=vmem, size = 0x8000, scoped, tag = 'input window, operand 4, single buffered']
    #allocation11 [shape = 'u8[2048]{0}', space=vmem, size = 0x800, scoped, tag = 'output window, operand 0, single buffered']
    %11 = vsyncpa [#allocation3], 0
    %12 = vsyncpa [#allocation6], 0
    %13 = vsyncpa [#allocation9], 0
    %14 = vsyncpa [#allocation4], 0
    // Predicated region
    $region2: #{tpu_custom_call.1} parent=1 // pred_check
      _
    $region3: #{tpu_custom_call.1} parent=1 // pred_check_branch
      %16 = sbr.rel (0) target = $region5
    $region4: #{tpu_custom_call.1} parent=1 // pred_region
      %s18 = ssub.s32 128, 128
      %19 = vsyncadd [#allocation3], %s18
      %s21 = sshll.u32 [#allocation2], 4
      %s22 = int_to_ptr.vmem [resolvable:$true] %s21
      %24 = dma.hbm_to_vmem [thread:$0]  %s0, 128, %s22, [#allocation3]
    $region5: #{tpu_custom_call.1} parent=1 // pred_fallthru
      _
    // Predicated region
    $region6: #{tpu_custom_call.1} parent=1 // pred_check
      _
    $region7: #{tpu_custom_call.1} parent=1 // pred_check_branch
      %26 = sbr.rel (0) target = $region9
    $region8: #{tpu_custom_call.1} parent=1 // pred_region
      %s28 = ssub.s32 640, 640
      %29 = vsyncadd [#allocation6], %s28
      %s30 = sshll.u32 [#allocation5], 4
      %s31 = int_to_ptr.vmem [resolvable:$true] %s30
      %36 = dma.hbm_to_vmem [thread:$0]  %s1, 640, %s31, [#allocation6], 64, 64, 4
    $region9: #{tpu_custom_call.1} parent=1 // pred_fallthru
      _
    // Predicated region
    $region10: #{tpu_custom_call.1} parent=1 // pred_check
      _
    $region11: #{tpu_custom_call.1} parent=1 // pred_check_branch
      %38 = sbr.rel (0) target = $region13
    $region12: #{tpu_custom_call.1} parent=1 // pred_region
      %s40 = ssub.s32 1024, 1024
      %41 = vsyncadd [#allocation6], %s40
      %s42 = sshll.u32 [#allocation7], 4
      %s43 = int_to_ptr.vmem [resolvable:$true] %s42
      %48 = dma.hbm_to_vmem [thread:$0]  %s2, 1024, %s43, [#allocation6], 64, 64, 4
    $region13: #{tpu_custom_call.1} parent=1 // pred_fallthru
      _
    // Predicated region
    $region14: #{tpu_custom_call.1} parent=1 // pred_check
      _
    $region15: #{tpu_custom_call.1} parent=1 // pred_check_branch
      %50 = sbr.rel (0) target = $region17
    $region16: #{tpu_custom_call.1} parent=1 // pred_region
      %s52 = ssub.s32 1024, 1024
      %53 = vsyncadd [#allocation9], %s52
      %s54 = sshll.u32 [#allocation8], 4
      %s55 = int_to_ptr.vmem [resolvable:$true] %s54
      %60 = dma.hbm_to_vmem [thread:$0]  %s3, 1024, %s55, [#allocation9], 64, 64, 4
    $region17: #{tpu_custom_call.1} parent=1 // pred_fallthru
      _
    // Predicated region
    $region18: #{tpu_custom_call.1} parent=1 // pred_check
      _
    $region19: #{tpu_custom_call.1} parent=1 // pred_check_branch
      %62 = sbr.rel (0) target = $region21
    $region20: #{tpu_custom_call.1} parent=1 // pred_region
      %s64 = ssub.s32 1024, 1024
      %65 = vsyncadd [#allocation9], %s64
      %s66 = sshll.u32 [#allocation10], 4
      %s67 = int_to_ptr.vmem [resolvable:$true] %s66
      %72 = dma.hbm_to_vmem [thread:$0]  %s4, 1024, %s67, [#allocation9], 64, 64, 4
    $region21: #{tpu_custom_call.1} parent=1 // pred_fallthru
      _
    // Predicated region
    $region22: #{tpu_custom_call.1} parent=1 // pred_check
      _
    $region23: #{tpu_custom_call.1} parent=1 // pred_check_branch
      %74 = sbr.rel (0) target = $region25
    $region24: #{tpu_custom_call.1} parent=1 // pred_region
      _
    $region25: #{tpu_custom_call.1} parent=1 // pred_fallthru
      _
    // Predicated region
    $region26: #{tpu_custom_call.1} parent=1 // pred_check
      _
    $region27: #{tpu_custom_call.1} parent=1 // pred_check_branch
      %76 = sbr.rel (0) target = $region29
    $region28: #{tpu_custom_call.1} parent=1 // pred_region
      %77 = dma.done [#allocation3], 128
    $region29: #{tpu_custom_call.1} parent=1 // pred_fallthru
      _
    // Predicated region
    $region30: #{tpu_custom_call.1} parent=1 // pred_check
      _
    $region31: #{tpu_custom_call.1} parent=1 // pred_check_branch
      %79 = sbr.rel (0) target = $region33
    $region32: #{tpu_custom_call.1} parent=1 // pred_region
      %80 = dma.done [#allocation6], 640
    $region33: #{tpu_custom_call.1} parent=1 // pred_fallthru
      _
    // Predicated region
    $region34: #{tpu_custom_call.1} parent=1 // pred_check
      _
    $region35: #{tpu_custom_call.1} parent=1 // pred_check_branch
      %82 = sbr.rel (0) target = $region37
    $region36: #{tpu_custom_call.1} parent=1 // pred_region
      %83 = dma.done [#allocation6], 1024
    $region37: #{tpu_custom_call.1} parent=1 // pred_fallthru
      _
    // Predicated region
    $region38: #{tpu_custom_call.1} parent=1 // pred_check
      _
    $region39: #{tpu_custom_call.1} parent=1 // pred_check_branch
      %85 = sbr.rel (0) target = $region41
    $region40: #{tpu_custom_call.1} parent=1 // pred_region
      %86 = dma.done [#allocation9], 1024
    $region41: #{tpu_custom_call.1} parent=1 // pred_fallthru
      _
    // Predicated region
    $region42: #{tpu_custom_call.1} parent=1 // pred_check
      _
    $region43: #{tpu_custom_call.1} parent=1 // pred_check_branch
      %88 = sbr.rel (0) target = $region45
    $region44: #{tpu_custom_call.1} parent=1 // pred_region
      %89 = dma.done [#allocation9], 1024
    $region45: #{tpu_custom_call.1} parent=1 // pred_fallthru
      _
    %v91 = vld [vmem:[#allocation2] sm:$0xff]
    %v92 = vpack.c.bf16 %v91, %v91
    %v93 = vld [vmem:[#allocation5] sm:$0xf]
    %v94 = vld [vmem:[#allocation5 + $0x4] sm:$0xf]
    %v95 = vld [vmem:[#allocation5 + $0x8] sm:$0xf]
    %v96 = vld [vmem:[#allocation5 + $0xc] sm:$0xf]
    %v97 = vld [vmem:[#allocation5 + $0x10] sm:$0xf]
    %v98 = vld [vmem:[#allocation5 + $0x14] sm:$0xf]
    %v99 = vld [vmem:[#allocation5 + $0x18] sm:$0xf]
    %v100 = vld [vmem:[#allocation5 + $0x1c] sm:$0xf]
    %v101 = vld [vmem:[#allocation5 + $0x20] sm:$0xf]
    %v102 = vld [vmem:[#allocation5 + $0x24] sm:$0x3]
    %v103 = vld [vmem:[%s5] sm:$0x1]
    %v104 = vlaneseq
    %v105 = vshrl.u32 %v104, 7
    %v106 = vsub.s32 0, %v105
    %v107 = vrot.slane %v103, %v106
    %v118 = vunpack.c.l.b16 %v93
    %v119 = vunpack.c.l.b16 %v94
    %v120 = vunpack.c.l.b16 %v95
    %v121 = vunpack.c.l.b16 %v96
    %v122 = vunpack.c.l.b16 %v97
    %v123 = vunpack.c.l.b16 %v98
    %v124 = vunpack.c.l.b16 %v99
    %v125 = vunpack.c.l.b16 %v100
    %v126 = vunpack.c.l.b16 %v101
    %v127 = vunpack.c.l.b16 %v102
    %v128 = vpack.c.b16 %v119, %v118
    %v129 = vpack.c.b16 %v121, %v120
    %v130 = vpack.c.b16 %v123, %v122
    %v131 = vpack.c.b16 %v125, %v124
    %v132 = vpack.c.b16 %v127, %v126
    %vm137 = vcmask 621568
    %v139 = vsel %vm137, %v92, 0
    %vm141 = vcmask 1045504
    %v143 = vsel %vm141, %v132, 0
    %145 = vmatprep.subr.bf16.mxu0 0
    %146 = vmatpush1.bf16.msra.mxu0 0
    %147 = vmatprep.subr.bf16.mxu0 0
    %148 = vmatpush1.bf16.msra.mxu0 0
    %149 = vmatprep.subr.bf16.mxu0 0
    %150 = vmatpush1.bf16.msra.mxu0 0
    %151 = vmatprep.subr.bf16.mxu0 0
    %152 = vmatpush1.bf16.msra.mxu0 %v143
    %153 = vmatprep.subr.bf16.mxu0 0
    %154 = vmatpush1.bf16.msra.mxu0 %v131
    %155 = vmatprep.subr.bf16.mxu0 0
    %156 = vmatpush1.bf16.msra.mxu0 %v130
    %157 = vmatprep.subr.bf16.mxu0 0
    %158 = vmatpush1.bf16.msra.mxu0 %v129
    %159 = vmatprep.subr.bf16.mxu0 0
    %160 = vmatpush1.bf16.msra.mxu0 %v128
    %161 = vmatprep.subr.bf16.mxu0 0
    %162 = vmatpush2.bf16.msra.mxu0 0
    %163 = vmatprep.subr.bf16.mxu0 0
    %164 = vmatpush2.bf16.msra.mxu0 0
    %165 = vmatprep.subr.bf16.mxu0 0
    %166 = vmatpush2.bf16.msra.mxu0 0
    %167 = vmatprep.subr.bf16.mxu0 0
    %168 = vmatpush2.bf16.msra.mxu0 0
    %169 = vmatprep.subr.bf16.mxu0 0
    %170 = vmatpush2.bf16.msra.mxu0 0
    %171 = vmatprep.subr.bf16.mxu0 0
    %172 = vmatpush2.bf16.msra.mxu0 0
    %173 = vmatprep.subr.bf16.mxu0 0
    %174 = vmatpush2.bf16.msra.mxu0 0
    %175 = vmatprep.subr.bf16.mxu0 0
    %176 = vmatpush2.bf16.msra.mxu0 0
    %177 = vmatprep.mubr.bf16.mxu0 0
    %178 = vmatmul.mubr.bf16.gmra.mxu0 %v139
    %v179 = vpop.f32.mrf.mxu0
    %v180 = vadd.f32 %v107, %v179
    %v181 = vpop.f32.mrf.mxu0
    %v182 = vpop.f32.mrf.mxu0
    %v183 = vpop.f32.mrf.mxu0
    %184 = vdwg.mxu0
    %v185 = vmax.f32 %v180, 0.0
    %v186 = vpack.c.bf16 %v185, %v185
    %v187 = vld [vmem:[#allocation7] sm:$0xf]
    %v188 = vld [vmem:[#allocation7 + $0x4] sm:$0xf]
    %v189 = vld [vmem:[#allocation7 + $0x8] sm:$0xf]
    %v190 = vld [vmem:[#allocation7 + $0xc] sm:$0xf]
    %v191 = vld [vmem:[#allocation7 + $0x10] sm:$0xf]
    %v192 = vld [vmem:[#allocation7 + $0x14] sm:$0xf]
    %v193 = vld [vmem:[#allocation7 + $0x18] sm:$0xf]
    %v194 = vld [vmem:[#allocation7 + $0x1c] sm:$0xf]
    %v195 = vld [vmem:[#allocation7 + $0x20] sm:$0xf]
    %v196 = vld [vmem:[#allocation7 + $0x24] sm:$0xf]
    %v197 = vld [vmem:[#allocation7 + $0x28] sm:$0xf]
    %v198 = vld [vmem:[#allocation7 + $0x2c] sm:$0xf]
    %v199 = vld [vmem:[#allocation7 + $0x30] sm:$0xf]
    %v200 = vld [vmem:[#allocation7 + $0x34] sm:$0xf]
    %v201 = vld [vmem:[#allocation7 + $0x38] sm:$0xf]
    %v202 = vld [vmem:[#allocation7 + $0x3c] sm:$0xf]
    %v203 = vld [vmem:[%s5 + $0x1] sm:$0x1]
    %v204 = vlaneseq
    %v205 = vshrl.u32 %v204, 7
    %v206 = vsub.s32 0, %v205
    %v207 = vrot.slane %v203, %v206
    %v224 = vunpack.c.l.b16 %v187
    %v225 = vunpack.c.l.b16 %v188
    %v226 = vunpack.c.l.b16 %v189
    %v227 = vunpack.c.l.b16 %v190
    %v228 = vunpack.c.l.b16 %v191
    %v229 = vunpack.c.l.b16 %v192
    %v230 = vunpack.c.l.b16 %v193
    %v231 = vunpack.c.l.b16 %v194
    %v232 = vunpack.c.l.b16 %v195
    %v233 = vunpack.c.l.b16 %v196
    %v234 = vunpack.c.l.b16 %v197
    %v235 = vunpack.c.l.b16 %v198
    %v236 = vunpack.c.l.b16 %v199
    %v237 = vunpack.c.l.b16 %v200
    %v238 = vunpack.c.l.b16 %v201
    %v239 = vunpack.c.l.b16 %v202
    %v240 = vpack.c.b16 %v225, %v224
    %v241 = vpack.c.b16 %v227, %v226
    %v242 = vpack.c.b16 %v229, %v228
    %v243 = vpack.c.b16 %v231, %v230
    %v244 = vpack.c.b16 %v233, %v232
    %v245 = vpack.c.b16 %v235, %v234
    %v246 = vpack.c.b16 %v237, %v236
    %v247 = vpack.c.b16 %v239, %v238
    %256 = vmatprep.subr.bf16.mxu0 0
    %257 = vmatpush1.bf16.msra.mxu0 %v247
    %258 = vmatprep.subr.bf16.mxu0 0
    %259 = vmatpush1.bf16.msra.mxu0 %v246
    %260 = vmatprep.subr.bf16.mxu0 0
    %261 = vmatpush1.bf16.msra.mxu0 %v245
    %262 = vmatprep.subr.bf16.mxu0 0
    %263 = vmatpush1.bf16.msra.mxu0 %v244
    %264 = vmatprep.subr.bf16.mxu0 0
    %265 = vmatpush1.bf16.msra.mxu0 %v243
    %266 = vmatprep.subr.bf16.mxu0 0
    %267 = vmatpush1.bf16.msra.mxu0 %v242
    %268 = vmatprep.subr.bf16.mxu0 0
    %269 = vmatpush1.bf16.msra.mxu0 %v241
    %270 = vmatprep.subr.bf16.mxu0 0
    %271 = vmatpush1.bf16.msra.mxu0 %v240
    %272 = vmatprep.subr.bf16.mxu0 0
    %273 = vmatpush2.bf16.msra.mxu0 0
    %274 = vmatprep.subr.bf16.mxu0 0
    %275 = vmatpush2.bf16.msra.mxu0 0
    %276 = vmatprep.subr.bf16.mxu0 0
    %277 = vmatpush2.bf16.msra.mxu0 0
    %278 = vmatprep.subr.bf16.mxu0 0
    %279 = vmatpush2.bf16.msra.mxu0 0
    %280 = vmatprep.subr.bf16.mxu0 0
    %281 = vmatpush2.bf16.msra.mxu0 0
    %282 = vmatprep.subr.bf16.mxu0 0
    %283 = vmatpush2.bf16.msra.mxu0 0
    %284 = vmatprep.subr.bf16.mxu0 0
    %285 = vmatpush2.bf16.msra.mxu0 0
    %286 = vmatprep.subr.bf16.mxu0 0
    %287 = vmatpush2.bf16.msra.mxu0 0
    %288 = vmatprep.mubr.bf16.mxu0 0
    %289 = vmatmul.mubr.bf16.gmra.mxu0 %v186
    %v290 = vpop.f32.mrf.mxu0
    %v291 = vadd.f32 %v207, %v290
    %v292 = vpop.f32.mrf.mxu0
    %v293 = vpop.f32.mrf.mxu0
    %v294 = vpop.f32.mrf.mxu0
    %295 = vdwg.mxu0
    %v296 = vmax.f32 %v291, 0.0
    %v297 = vpack.c.bf16 %v296, %v296
    %v298 = vld [vmem:[#allocation8] sm:$0xf]
    %v299 = vld [vmem:[#allocation8 + $0x4] sm:$0xf]
    %v300 = vld [vmem:[#allocation8 + $0x8] sm:$0xf]
    %v301 = vld [vmem:[#allocation8 + $0xc] sm:$0xf]
    %v302 = vld [vmem:[#allocation8 + $0x10] sm:$0xf]
    %v303 = vld [vmem:[#allocation8 + $0x14] sm:$0xf]
    %v304 = vld [vmem:[#allocation8 + $0x18] sm:$0xf]
    %v305 = vld [vmem:[#allocation8 + $0x1c] sm:$0xf]
    %v306 = vld [vmem:[#allocation8 + $0x20] sm:$0xf]
    %v307 = vld [vmem:[#allocation8 + $0x24] sm:$0xf]
    %v308 = vld [vmem:[#allocation8 + $0x28] sm:$0xf]
    %v309 = vld [vmem:[#allocation8 + $0x2c] sm:$0xf]
    %v310 = vld [vmem:[#allocation8 + $0x30] sm:$0xf]
    %v311 = vld [vmem:[#allocation8 + $0x34] sm:$0xf]
    %v312 = vld [vmem:[#allocation8 + $0x38] sm:$0xf]
    %v313 = vld [vmem:[#allocation8 + $0x3c] sm:$0xf]
    %v314 = vld [vmem:[%s5 + $0x2] sm:$0x1]
    %v315 = vlaneseq
    %v316 = vshrl.u32 %v315, 7
    %v317 = vsub.s32 0, %v316
    %v318 = vrot.slane %v314, %v317
    %v335 = vunpack.c.l.b16 %v298
    %v336 = vunpack.c.l.b16 %v299
    %v337 = vunpack.c.l.b16 %v300
    %v338 = vunpack.c.l.b16 %v301
    %v339 = vunpack.c.l.b16 %v302
    %v340 = vunpack.c.l.b16 %v303
    %v341 = vunpack.c.l.b16 %v304
    %v342 = vunpack.c.l.b16 %v305
    %v343 = vunpack.c.l.b16 %v306
    %v344 = vunpack.c.l.b16 %v307
    %v345 = vunpack.c.l.b16 %v308
    %v346 = vunpack.c.l.b16 %v309
    %v347 = vunpack.c.l.b16 %v310
    %v348 = vunpack.c.l.b16 %v311
    %v349 = vunpack.c.l.b16 %v312
    %v350 = vunpack.c.l.b16 %v313
    %v351 = vpack.c.b16 %v336, %v335
    %v352 = vpack.c.b16 %v338, %v337
    %v353 = vpack.c.b16 %v340, %v339
    %v354 = vpack.c.b16 %v342, %v341
    %v355 = vpack.c.b16 %v344, %v343
    %v356 = vpack.c.b16 %v346, %v345
    %v357 = vpack.c.b16 %v348, %v347
    %v358 = vpack.c.b16 %v350, %v349
    %367 = vmatprep.subr.bf16.mxu0 0
    %368 = vmatpush1.bf16.msra.mxu0 %v358
    %369 = vmatprep.subr.bf16.mxu0 0
    %370 = vmatpush1.bf16.msra.mxu0 %v357
    %371 = vmatprep.subr.bf16.mxu0 0
    %372 = vmatpush1.bf16.msra.mxu0 %v356
    %373 = vmatprep.subr.bf16.mxu0 0
    %374 = vmatpush1.bf16.msra.mxu0 %v355
    %375 = vmatprep.subr.bf16.mxu0 0
    %376 = vmatpush1.bf16.msra.mxu0 %v354
    %377 = vmatprep.subr.bf16.mxu0 0
    %378 = vmatpush1.bf16.msra.mxu0 %v353
    %379 = vmatprep.subr.bf16.mxu0 0
    %380 = vmatpush1.bf16.msra.mxu0 %v352
    %381 = vmatprep.subr.bf16.mxu0 0
    %382 = vmatpush1.bf16.msra.mxu0 %v351
    %383 = vmatprep.subr.bf16.mxu0 0
    %384 = vmatpush2.bf16.msra.mxu0 0
    %385 = vmatprep.subr.bf16.mxu0 0
    %386 = vmatpush2.bf16.msra.mxu0 0
    %387 = vmatprep.subr.bf16.mxu0 0
    %388 = vmatpush2.bf16.msra.mxu0 0
    %389 = vmatprep.subr.bf16.mxu0 0
    %390 = vmatpush2.bf16.msra.mxu0 0
    %391 = vmatprep.subr.bf16.mxu0 0
    %392 = vmatpush2.bf16.msra.mxu0 0
    %393 = vmatprep.subr.bf16.mxu0 0
    %394 = vmatpush2.bf16.msra.mxu0 0
    %395 = vmatprep.subr.bf16.mxu0 0
    %396 = vmatpush2.bf16.msra.mxu0 0
    %397 = vmatprep.subr.bf16.mxu0 0
    %398 = vmatpush2.bf16.msra.mxu0 0
    %399 = vmatprep.mubr.bf16.mxu0 0
    %400 = vmatmul.mubr.bf16.gmra.mxu0 %v297
    %v401 = vpop.f32.mrf.mxu0
    %v402 = vadd.f32 %v318, %v401
    %v403 = vpop.f32.mrf.mxu0
    %v404 = vpop.f32.mrf.mxu0
    %v405 = vpop.f32.mrf.mxu0
    %406 = vdwg.mxu0
    %v407 = vmax.f32 %v402, 0.0
    %v408 = vpack.c.bf16 %v407, %v407
    %v409 = vld [vmem:[#allocation10] sm:$0xf]
    %v410 = vld [vmem:[#allocation10 + $0x4] sm:$0xf]
    %v411 = vld [vmem:[#allocation10 + $0x8] sm:$0xf]
    %v412 = vld [vmem:[#allocation10 + $0xc] sm:$0xf]
    %v413 = vld [vmem:[#allocation10 + $0x10] sm:$0xf]
    %v414 = vld [vmem:[#allocation10 + $0x14] sm:$0xf]
    %v415 = vld [vmem:[#allocation10 + $0x18] sm:$0xf]
    %v416 = vld [vmem:[#allocation10 + $0x1c] sm:$0xf]
    %v417 = vld [vmem:[#allocation10 + $0x20] sm:$0xf]
    %v418 = vld [vmem:[#allocation10 + $0x24] sm:$0xf]
    %v419 = vld [vmem:[#allocation10 + $0x28] sm:$0xf]
    %v420 = vld [vmem:[#allocation10 + $0x2c] sm:$0xf]
    %v421 = vld [vmem:[#allocation10 + $0x30] sm:$0xf]
    %v422 = vld [vmem:[#allocation10 + $0x34] sm:$0xf]
    %v423 = vld [vmem:[#allocation10 + $0x38] sm:$0xf]
    %v424 = vld [vmem:[#allocation10 + $0x3c] sm:$0xf]
    %v425 = vld [vmem:[%s5 + $0x3] sm:$0x1]
    %v426 = vlaneseq
    %v427 = vshrl.u32 %v426, 7
    %v428 = vsub.s32 0, %v427
    %v429 = vrot.slane %v425, %v428
    %v446 = vunpack.c.l.b16 %v409
    %v447 = vunpack.c.l.b16 %v410
    %v448 = vunpack.c.l.b16 %v411
    %v449 = vunpack.c.l.b16 %v412
    %v450 = vunpack.c.l.b16 %v413
    %v451 = vunpack.c.l.b16 %v414
    %v452 = vunpack.c.l.b16 %v415
    %v453 = vunpack.c.l.b16 %v416
    %v454 = vunpack.c.l.b16 %v417
    %v455 = vunpack.c.l.b16 %v418
    %v456 = vunpack.c.l.b16 %v419
    %v457 = vunpack.c.l.b16 %v420
    %v458 = vunpack.c.l.b16 %v421
    %v459 = vunpack.c.l.b16 %v422
    %v460 = vunpack.c.l.b16 %v423
    %v461 = vunpack.c.l.b16 %v424
    %v462 = vpack.c.b16 %v447, %v446
    %v463 = vpack.c.b16 %v449, %v448
    %v464 = vpack.c.b16 %v451, %v450
    %v465 = vpack.c.b16 %v453, %v452
    %v466 = vpack.c.b16 %v455, %v454
    %v467 = vpack.c.b16 %v457, %v456
    %v468 = vpack.c.b16 %v459, %v458
    %v469 = vpack.c.b16 %v461, %v460
    %478 = vmatprep.subr.bf16.mxu0 0
    %479 = vmatpush1.bf16.msra.mxu0 %v469
    %480 = vmatprep.subr.bf16.mxu0 0
    %481 = vmatpush1.bf16.msra.mxu0 %v468
    %482 = vmatprep.subr.bf16.mxu0 0
    %483 = vmatpush1.bf16.msra.mxu0 %v467
    %484 = vmatprep.subr.bf16.mxu0 0
    %485 = vmatpush1.bf16.msra.mxu0 %v466
    %486 = vmatprep.subr.bf16.mxu0 0
    %487 = vmatpush1.bf16.msra.mxu0 %v465
    %488 = vmatprep.subr.bf16.mxu0 0
    %489 = vmatpush1.bf16.msra.mxu0 %v464
    %490 = vmatprep.subr.bf16.mxu0 0
    %491 = vmatpush1.bf16.msra.mxu0 %v463
    %492 = vmatprep.subr.bf16.mxu0 0
    %493 = vmatpush1.bf16.msra.mxu0 %v462
    %494 = vmatprep.subr.bf16.mxu0 0
    %495 = vmatpush2.bf16.msra.mxu0 0
    %496 = vmatprep.subr.bf16.mxu0 0
    %497 = vmatpush2.bf16.msra.mxu0 0
    %498 = vmatprep.subr.bf16.mxu0 0
    %499 = vmatpush2.bf16.msra.mxu0 0
    %500 = vmatprep.subr.bf16.mxu0 0
    %501 = vmatpush2.bf16.msra.mxu0 0
    %502 = vmatprep.subr.bf16.mxu0 0
    %503 = vmatpush2.bf16.msra.mxu0 0
    %504 = vmatprep.subr.bf16.mxu0 0
    %505 = vmatpush2.bf16.msra.mxu0 0
    %506 = vmatprep.subr.bf16.mxu0 0
    %507 = vmatpush2.bf16.msra.mxu0 0
    %508 = vmatprep.subr.bf16.mxu0 0
    %509 = vmatpush2.bf16.msra.mxu0 0
    %510 = vmatprep.mubr.bf16.mxu0 0
    %511 = vmatmul.mubr.bf16.gmra.mxu0 %v408
    %v512 = vpop.f32.mrf.mxu0
    %v513 = vadd.f32 %v429, %v512
    %v514 = vpop.f32.mrf.mxu0
    %v515 = vpop.f32.mrf.mxu0
    %v516 = vpop.f32.mrf.mxu0
    %517 = vdwg.mxu0
    %v518 = vpack.c.bf16 %v513, %v513
    %519 = vst [vmem:[#allocation11] sm:$0xf] %v518
    // Predicated region
    $region46: #{tpu_custom_call.1} parent=1 // pred_check
      _
    $region47: #{tpu_custom_call.1} parent=1 // pred_check_branch
      %521 = sbr.rel (0) target = $region49
    $region48: #{tpu_custom_call.1} parent=1 // pred_region
      %s523 = ssub.s32 64, 64
      %524 = vsyncadd [#allocation4], %s523
      %s526 = sshll.u32 [#allocation11], 4
      %s527 = int_to_ptr.vmem [resolvable:$true] %s526
      %529 = dma.vmem_to_hbm [thread:$0]  %s527, 64, %s6, [#allocation4]
    $region49: #{tpu_custom_call.1} parent=1 // pred_fallthru
      _
    // Predicated region
    $region50: #{tpu_custom_call.1} parent=1 // pred_check
      _
    $region51: #{tpu_custom_call.1} parent=1 // pred_check_branch
      %531 = sbr.rel (0) target = $region53
    $region52: #{tpu_custom_call.1} parent=1 // pred_region
      %532 = dma.done [#allocation4], 64
    $region53: #{tpu_custom_call.1} parent=1 // pred_fallthru
      _
    %533 = vsyncpa [#allocation3], 1
    %534 = vsyncpa [#allocation6], 1
    %535 = vsyncpa [#allocation9], 1
    %536 = vsyncpa [#allocation4], 1

</llo_original>
